<compile_context>
chip_gen: v7x
topology: tpu7x:2x2x1
jax: 0.10.0
libtpu: 0.0.40
codegen_flags: <defaults>
</compile_context>

<pallas_src>
import functools

import jax
import jax.numpy as jnp
from jax.experimental import pallas as pl
from jax.experimental.pallas import tpu as pltpu


def _bahdanau_kernel(wq_ref, k_ref, uaT_ref, va_ref, ctx_ref, w_ref, *,
                     valid_s, tanh_in_bf16):
    Bt, S, H = k_ref.shape
    k = k_ref[...]                                              # (Bt, S, H) bf16/f32

    # Ua(keys) as ONE MXU matmul over the flattened (Bt*S, H) slab.
    # bUa was folded into wq in the wrapper, so no bias add here.
    uk = jnp.dot(k.reshape(Bt * S, H), uaT_ref[...],
                 preferred_element_type=jnp.float32).reshape(Bt, S, H)

    # tanh(Wa(q) + bWa + bUa + Ua(k));  the query projection was hoisted.
    z = wq_ref[...][:, None, :] + uk                            # (Bt, S, H) f32
    if tanh_in_bf16:
        # Optional EUP-relief path for v6e/v7x (bf16 EUP ~2x throughput).
        t = jnp.tanh(z.astype(jnp.bfloat16)).astype(jnp.float32)
    else:
        t = jnp.tanh(z)

    # Va projection as a lane reduction (bVa dropped: softmax-invariant).
    score = jnp.sum(t * va_ref[...], axis=-1)                   # (Bt, S) f32

    if valid_s != S:  # static: only emitted when S was padded to a multiple of 8
        lane = jax.lax.broadcasted_iota(jnp.int32, score.shape, 1)
        score = jnp.where(lane < valid_s, score, -jnp.inf)

    # Softmax over the (lane) sequence axis.
    m = jnp.max(score, axis=-1, keepdims=True)
    e = jnp.exp(score - m)
    denom = jnp.sum(e, axis=-1, keepdims=True)
    inv = pl.reciprocal(denom, approx=True)                     # EUP slot
    inv = inv * (2.0 - denom * inv)                             # 1 Newton step -> f32 acc.

    # context = (sum_s e[b,s] * keys[b,s,:]) * inv  -> normalize on the small
    # (Bt,H) tile instead of the (Bt,S,H) product.
    ctx = jnp.sum(e[:, :, None] * k.astype(jnp.float32), axis=1) * inv

    ctx_ref[...] = ctx.astype(ctx_ref.dtype)
    w_ref[...] = (e * inv).astype(w_ref.dtype)


def _tpu_generation_info():
    """Best-effort (VMEM capacity bytes, #TensorCores/chip); safe fallbacks."""
    vmem = 64 * 1024 * 1024          # conservative default (v7x per-TC VMEM)
    num_tc = 1
    try:
        info = pltpu.get_tpu_info()
        v = getattr(info, "vmem_capacity_bytes", None)
        if v:
            vmem = int(v)
    except Exception:
        pass
    try:
        kind = jax.devices()[0].device_kind.lower()
        if "v7" in kind:             # 2 TensorCores per chip
            num_tc = 2
    except Exception:
        pass
    return vmem, num_tc


def _choose_block_b(B, S_pad, H, key_bytes, vmem_capacity, num_tc):
    """Largest legal Bt whose VMEM working set fits ~45% of this chip's VMEM."""
    # Per batch row per step: double-buffered keys tile (key_bytes) plus
    # ~3 f32 (S,H)-sized intermediates (uk, tanh output, e*k product).
    per_b = S_pad * H * (2 * key_bytes + 3 * 4) + 128
    budget = int(vmem_capacity * 0.45)
    bt = max(1, min(B, budget // per_b))

    def _ok(v):
        # Must divide B and keep the (8,128) rule on the 2-D (Bt,*) blocks.
        return v >= 1 and B % v == 0 and (v == B or v % 8 == 0)

    while bt > 1 and not _ok(bt):
        bt -= 1
    if not _ok(bt):
        bt = B

    if num_tc > 1 and bt > 1:
        # v7x only: grid length should be a multiple of #TensorCores so the
        # "parallel" batch axis keeps both cores busy.
        cand = bt
        while cand > 1 and not (_ok(cand) and (B // cand) % num_tc == 0):
            cand -= 1
        if _ok(cand) and (B // cand) % num_tc == 0:
            bt = cand
    return bt


def bahdanau_attention(query, keys, waT, bwa, uaT, bua, vaT, bva, *,
                       block_b=None, use_bf16=True, tanh_in_bf16=False):
    """query: (B,1,H), keys: (B,S,H). waT/uaT = Linear.weight.T (H,H), vaT (H,1).

    use_bf16: ship keys/Ua^T to the kernel as bf16 (fast MXU path, half the HBM
    traffic); all tanh/softmax/context math stays f32 in-kernel.
    """
    B, _, H = query.shape
    _, S, _ = keys.shape
    del bva  # constant shift of every score -> cancelled exactly by the softmax

    out_dtype = query.dtype
    f32 = jnp.float32

    # Hoisted Wa(query) + bWa + bUa : one dense (B,H)@(H,H) XLA matmul.
    wq = (query.reshape(B, H).astype(f32) @ waT.astype(f32)
          + bwa.astype(f32) + bua.astype(f32))                    # (B, H) f32

    # Explicit operand dtypes so the MXU sees matched bf16 (or f32) operands.
    mxu_dtype = jnp.bfloat16 if (use_bf16 or keys.dtype == jnp.bfloat16) else keys.dtype
    keys_x = keys.astype(mxu_dtype)
    uaT_x = uaT.astype(mxu_dtype)
    va2 = vaT.reshape(1, H).astype(f32)                           # Va weight as a lane row

    # Pad S to a multiple of 8 so the in-kernel (Bt,S,H)<->(Bt*S,H) reshapes
    # stay tile-aligned (no hidden VMEM relayout copies).
    S_pad = ((S + 7) // 8) * 8
    if S_pad != S:
        keys_x = jnp.pad(keys_x, ((0, 0), (0, S_pad - S), (0, 0)))

    key_bytes = jnp.dtype(mxu_dtype).itemsize
    out_bytes = jnp.dtype(out_dtype).itemsize
    vmem_capacity, num_tc = _tpu_generation_info()

    Bt = block_b if block_b is not None else _choose_block_b(
        B, S_pad, H, key_bytes, vmem_capacity, num_tc)
    # TODO(synk): for very long S (keys tile > VMEM even at Bt=1 — threshold is
    # ~2x shorter on v7x's 64 MiB VMEM), add an "arbitrary" S grid axis with
    # online-softmax (m/l/acc) scratch accumulators.

    # VMEM sizing: double-buffered keys tile + f32 intermediates + params + outs.
    needed = (2 * Bt * S_pad * H * key_bytes            # keys (double-buffered)
              + 3 * Bt * S_pad * H * 4                  # uk / tanh / e*k (f32)
              + H * H * key_bytes + (Bt + 1) * H * 4    # Ua^T, wq, Va
              + 2 * Bt * (H + S_pad) * out_bytes        # outputs (double-buffered)
              + (1 << 20))                              # slack
    vmem_limit = int(min(vmem_capacity * 0.9, max(32 << 20, needed * 3 // 2)))

    grid_spec = pltpu.PrefetchScalarGridSpec(
        num_scalar_prefetch=0,
        grid=(B // Bt,),
        in_specs=[
            pl.BlockSpec((Bt, H), lambda b: (b, 0)),              # Wa(q)+bWa+bUa
            pl.BlockSpec((Bt, S_pad, H), lambda b: (b, 0, 0)),    # keys (bf16)
            pl.BlockSpec((H, H), lambda b: (0, 0)),               # Ua^T (grid-invariant)
            pl.BlockSpec((1, H), lambda b: (0, 0)),               # Va row
        ],
        out_specs=[
            pl.BlockSpec((Bt, H), lambda b: (b, 0)),              # context (lane-dense)
            pl.BlockSpec((Bt, S_pad), lambda b: (b, 0)),          # weights (lane-dense)
        ],
    )

    cost = pl.CostEstimate(
        flops=2 * B * S_pad * H * H + 6 * B * S_pad * H + 6 * B * S_pad,
        transcendentals=B * S_pad * (H + 1) + B,
        bytes_accessed=(B * S_pad * H + H * H) * key_bytes
                       + (B * H + H) * 4
                       + (B * H + B * S_pad) * out_bytes,
    )

    kernel = functools.partial(_bahdanau_kernel, valid_s=S, tanh_in_bf16=tanh_in_bf16)

    ctx2, w2 = pl.pallas_call(
        kernel,
        out_shape=(
            jax.ShapeDtypeStruct((B, H), out_dtype),
            jax.ShapeDtypeStruct((B, S_pad), out_dtype),
        ),
        grid_spec=grid_spec,
        compiler_params=pltpu.CompilerParams(
            dimension_semantics=("parallel",),
            vmem_limit_bytes=vmem_limit,
        ),
        cost_estimate=cost,
    )(wq, keys_x, uaT_x, va2)

    # Restore the module's (B,1,H)/(B,1,S) output layout (free reshapes).
    return ctx2.reshape(B, 1, H), w2[:, :S].reshape(B, 1, S)


def _reference(query, keys, waT, bwa, uaT, bua, vaT, bva):
    # Pure-JAX reference mirroring the PyTorch forward (bVa included to
    # confirm dropping it in the kernel is a softmax no-op).
    wq = query @ waT + bwa                       # (B, 1, H)
    uk = keys @ uaT + bua                        # (B, S, H)
    score = jnp.tanh(wq + uk) @ vaT + bva        # (B, S, 1)
    score = jnp.swapaxes(score, 1, 2)            # (B, 1, S)
    weights = jax.nn.softmax(score, axis=-1)
    context = weights @ keys                     # (B, 1, H)
    return context, weights


if __name__ == "__main__":
    B, S, H = 2, 8, 32
    key = jax.random.PRNGKey(0)
    k_q, k_k, k_wa, k_bwa, k_ua, k_bua, k_va, k_bva = jax.random.split(key, 8)

    query = jax.random.normal(k_q, (B, 1, H), dtype=jnp.float32)
    keys = jax.random.normal(k_k, (B, S, H), dtype=jnp.float32)

    # Deterministic parameter init (shapes follow nn.Linear(H,H), nn.Linear(H,1)).
    scale = 1.0 / jnp.sqrt(jnp.float32(H))
    waT = jax.random.uniform(k_wa, (H, H), jnp.float32, -scale, scale)   # Wa.weight.T
    bwa = jax.random.uniform(k_bwa, (H,), jnp.float32, -scale, scale)
    uaT = jax.random.uniform(k_ua, (H, H), jnp.float32, -scale, scale)   # Ua.weight.T
    bua = jax.random.uniform(k_bua, (H,), jnp.float32, -scale, scale)
    vaT = jax.random.uniform(k_va, (H, 1), jnp.float32, -scale, scale)   # Va.weight.T
    bva = jax.random.uniform(k_bva, (1,), jnp.float32, -scale, scale)

    ctx_ref, w_ref = _reference(query, keys, waT, bwa, uaT, bua, vaT, bva)

    # Exact f32 path: tight tolerance against the reference.
    ctx32, w32 = bahdanau_attention(query, keys, waT, bwa, uaT, bua, vaT, bva,
                                    use_bf16=False)
    jax.block_until_ready((ctx32, w32))
    assert ctx32.shape == (B, 1, H) and w32.shape == (B, 1, S)
    assert jnp.allclose(ctx32, ctx_ref, atol=1e-4, rtol=1e-4)
    assert jnp.allclose(w32, w_ref, atol=1e-4, rtol=1e-4)

    # Default performance path: bf16 keys/Ua transfer + bf16 MXU (f32 math).
    ctx, w = bahdanau_attention(query, keys, waT, bwa, uaT, bua, vaT, bva)
    jax.block_until_ready((ctx, w))
    assert ctx.shape == (B, 1, H) and w.shape == (B, 1, S)
    assert jnp.allclose(ctx, ctx_ref, atol=8e-2, rtol=8e-2)
    assert jnp.allclose(w, w_ref, atol=8e-2, rtol=8e-2)

    print("KERNEL_OK")
</pallas_src>

<mosaic_0001>
module attributes {stable_mosaic.version = 11 : i64} {
  func.func @_bahdanau_kernel(%arg0: i32, %arg1: memref<2x32xf32, #tpu.memory_space<vmem>>, %arg2: memref<2x8x32xf32, #tpu.memory_space<vmem>>, %arg3: memref<32x32xf32, #tpu.memory_space<vmem>>, %arg4: memref<1x32xf32, #tpu.memory_space<vmem>>, %arg5: memref<2x32xf32, #tpu.memory_space<vmem>>, %arg6: memref<2x8xf32, #tpu.memory_space<vmem>>) attributes {dimension_semantics = [#tpu.dimension_semantics<parallel>], iteration_bounds = array<i64: 1>, scalar_prefetch = 0 : i64, scratch_operands = 0 : i64, tpu.core_type = #tpu.core_type<tc>, window_params = [{transform_indices = @transform_0, window_bounds = array<i64: 2, 32>}, {transform_indices = @transform_1, window_bounds = array<i64: 2, 8, 32>}, {pipeline_mode = #tpu.pipeline_mode<synchronous>, transform_indices = @transform_2, window_bounds = array<i64: 32, 32>}, {pipeline_mode = #tpu.pipeline_mode<synchronous>, transform_indices = @transform_3, window_bounds = array<i64: 1, 32>}, {transform_indices = @transform_4, window_bounds = array<i64: 2, 32>}, {transform_indices = @transform_5, window_bounds = array<i64: 2, 8>}]} {
    %c0 = arith.constant 0 : index
    %c0_0 = arith.constant 0 : index
    %c0_1 = arith.constant 0 : index
    %0 = vector.load %arg2[%c0, %c0_0, %c0_1] : memref<2x8x32xf32, #tpu.memory_space<vmem>>, vector<2x8x32xf32>
    %1 = vector.shape_cast %0 : vector<2x8x32xf32> to vector<16x32xf32>
    %c0_2 = arith.constant 0 : index
    %c0_3 = arith.constant 0 : index
    %2 = vector.load %arg3[%c0_2, %c0_3] : memref<32x32xf32, #tpu.memory_space<vmem>>, vector<32x32xf32>
    %cst = arith.constant dense<0.000000e+00> : vector<16x32xf32>
    %3 = tpu.matmul %1, %2, %cst {dimension_numbers = #tpu.dot_dimension_numbers<[1], [0], [0], [1], [0, 0, 1, 1], [], []>} : vector<16x32xf32>, vector<32x32xf32>, vector<16x32xf32> -> vector<16x32xf32>
    %4 = vector.shape_cast %3 : vector<16x32xf32> to vector<2x8x32xf32>
    %c0_4 = arith.constant 0 : index
    %c0_5 = arith.constant 0 : index
    %5 = vector.load %arg1[%c0_4, %c0_5] : memref<2x32xf32, #tpu.memory_space<vmem>>, vector<2x32xf32>
    %6 = vector.shape_cast %5 : vector<2x32xf32> to vector<2x1x32xf32>
    %7 = vector.broadcast %6 : vector<2x1x32xf32> to vector<2x8x32xf32>
    %8 = arith.addf %7, %4 : vector<2x8x32xf32>
    %9 = math.tanh %8 : vector<2x8x32xf32>
    %c0_6 = arith.constant 0 : index
    %c0_7 = arith.constant 0 : index
    %10 = vector.load %arg4[%c0_6, %c0_7] : memref<1x32xf32, #tpu.memory_space<vmem>>, vector<1x32xf32>
    %11 = vector.shape_cast %10 : vector<1x32xf32> to vector<1x1x32xf32>
    %12 = vector.broadcast %11 : vector<1x1x32xf32> to vector<2x8x32xf32>
    %13 = arith.mulf %9, %12 : vector<2x8x32xf32>
    %cst_8 = arith.constant dense<0.000000e+00> : vector<2x8xf32>
    %14 = vector.multi_reduction <add>, %13, %cst_8 [2] : vector<2x8x32xf32> to vector<2x8xf32>
    %cst_9 = arith.constant dense<0xFF800000> : vector<2xf32>
    %15 = vector.multi_reduction <maximumf>, %14, %cst_9 [1] : vector<2x8xf32> to vector<2xf32>
    %16 = vector.shape_cast %15 : vector<2xf32> to vector<2x1xf32>
    %17 = vector.broadcast %16 : vector<2x1xf32> to vector<2x8xf32>
    %18 = arith.subf %14, %17 : vector<2x8xf32>
    %19 = math.exp %18 : vector<2x8xf32>
    %cst_10 = arith.constant dense<0.000000e+00> : vector<2xf32>
    %20 = vector.multi_reduction <add>, %19, %cst_10 [1] : vector<2x8xf32> to vector<2xf32>
    %21 = vector.shape_cast %20 : vector<2xf32> to vector<2x1xf32>
    %22 = tpu.reciprocal %21 {approx = true} : vector<2x1xf32> -> vector<2x1xf32>
    %23 = arith.mulf %21, %22 : vector<2x1xf32>
    %cst_11 = arith.constant 2.000000e+00 : f32
    %24 = vector.broadcast %cst_11 : f32 to vector<2x1xf32>
    %25 = arith.subf %24, %23 : vector<2x1xf32>
    %26 = arith.mulf %22, %25 : vector<2x1xf32>
    %27 = vector.shape_cast %19 : vector<2x8xf32> to vector<2x8x1xf32>
    %28 = vector.broadcast %27 : vector<2x8x1xf32> to vector<2x8x32xf32>
    %29 = arith.mulf %28, %0 : vector<2x8x32xf32>
    %cst_12 = arith.constant dense<0.000000e+00> : vector<2x32xf32>
    %30 = vector.multi_reduction <add>, %29, %cst_12 [1] : vector<2x8x32xf32> to vector<2x32xf32>
    %31 = vector.broadcast %26 : vector<2x1xf32> to vector<2x32xf32>
    %32 = arith.mulf %30, %31 : vector<2x32xf32>
    %c0_13 = arith.constant 0 : index
    %c0_14 = arith.constant 0 : index
    %33 = vector.load %arg5[%c0_13, %c0_14] : memref<2x32xf32, #tpu.memory_space<vmem>>, vector<2x32xf32>
    tpu.vector_store %arg5[%c0_13, %c0_14], %32 {strides = array<i32>} : memref<2x32xf32, #tpu.memory_space<vmem>>, vector<2x32xf32>,
    %34 = vector.broadcast %26 : vector<2x1xf32> to vector<2x8xf32>
    %35 = arith.mulf %19, %34 : vector<2x8xf32>
    %c0_15 = arith.constant 0 : index
    %c0_16 = arith.constant 0 : index
    %36 = vector.load %arg6[%c0_15, %c0_16] : memref<2x8xf32, #tpu.memory_space<vmem>>, vector<2x8xf32>
    tpu.vector_store %arg6[%c0_15, %c0_16], %35 {strides = array<i32>} : memref<2x8xf32, #tpu.memory_space<vmem>>, vector<2x8xf32>,
    return
  }
  func.func @transform_0(%arg0: i32) -> (i32, i32) {
    %c0_i32 = arith.constant 0 : i32
    %c0_i32_0 = arith.constant 0 : i32
    return %arg0, %c0_i32 : i32, i32
  }
  func.func @transform_1(%arg0: i32) -> (i32, i32, i32) {
    %c0_i32 = arith.constant 0 : i32
    %c0_i32_0 = arith.constant 0 : i32
    %c0_i32_1 = arith.constant 0 : i32
    return %arg0, %c0_i32, %c0_i32_0 : i32, i32, i32
  }
  func.func @transform_2(%arg0: i32) -> (i32, i32) {
    %c0_i32 = arith.constant 0 : i32
    %c0_i32_0 = arith.constant 0 : i32
    %c0_i32_1 = arith.constant 0 : i32
    return %c0_i32, %c0_i32_0 : i32, i32
  }
  func.func @transform_3(%arg0: i32) -> (i32, i32) {
    %c0_i32 = arith.constant 0 : i32
    %c0_i32_0 = arith.constant 0 : i32
    %c0_i32_1 = arith.constant 0 : i32
    return %c0_i32, %c0_i32_0 : i32, i32
  }
  func.func @transform_4(%arg0: i32) -> (i32, i32) {
    %c0_i32 = arith.constant 0 : i32
    %c0_i32_0 = arith.constant 0 : i32
    return %arg0, %c0_i32 : i32, i32
  }
  func.func @transform_5(%arg0: i32) -> (i32, i32) {
    %c0_i32 = arith.constant 0 : i32
    %c0_i32_0 = arith.constant 0 : i32
    return %arg0, %c0_i32 : i32, i32
  }
}

</mosaic_0001>

<llo_original>
// kernel: tpu_custom_call.1
$region0: #{tpu_custom_call.1}
  #allocation0 [shape = 'u32[]', space=smem, size = 0x4, offset = 0x4, fixed_abs, tag = 'smem constant byte address 0x4 - core index']
  #allocation1 [shape = 'u32[144,128]{1,0:T(1,128)}', space=vmem, size = 0x12000, scoped, tag = 'internal scratch']
  %s0 = inlined_call_operand.hbm [shape: f32[2,32], index: 0, kind: input, shape index: {}]
  %s1 = inlined_call_operand.hbm [shape: f32[2,8,32], index: 1, kind: input, shape index: {}]
  %s2 = inlined_call_operand.hbm [shape: f32[32,32], index: 2, kind: input, shape index: {}]
  %s3 = inlined_call_operand.vmem [shape: f32[1,32], index: 3, kind: input, shape index: {}]
  %s4 = inlined_call_operand.hbm [shape: f32[2,32], index: 4, kind: output, shape index: {0}]
  %s5 = inlined_call_operand.hbm [shape: f32[2,8], index: 5, kind: output, shape index: {1}]
  %6 = xla_tuple %s4, %s5
  %s7 = sld [smem:[#allocation0]]
  $region46: #{tpu_custom_call.1} parent=0
    _
  %s9 = ssub.s32 1, %s7
  %s10 = scalar_select 0, %s9, %s7
  $region1: #{tpu_custom_call.1} parent=0
    #allocation2 [shape = 'u8[1024]{0}', space=vmem, size = 0x400, scoped, tag = 'input window, operand 0, single buffered']
    #allocation3 [shape = 's32[1]{0}', space=sflag, size = 0x4, scoped, tag = 'scoped memory for tpu_custom_call.1']
    #allocation4 [shape = 's32[1]{0}', space=sflag, size = 0x4, scoped, tag = 'scoped memory for tpu_custom_call.1']
    #allocation5 [shape = 'u8[8192]{0}', space=vmem, size = 0x2000, scoped, tag = 'input window, operand 1, single buffered']
    #allocation6 [shape = 's32[1]{0}', space=sflag, size = 0x4, scoped, tag = 'scoped memory for tpu_custom_call.1']
    #allocation7 [shape = 'u8[16384]{0}', space=vmem, size = 0x4000, scoped, tag = 'input window, operand 2, single buffered']
    #allocation8 [shape = 'u8[1024]{0}', space=vmem, size = 0x400, scoped, tag = 'output window, operand 0, single buffered']
    #allocation9 [shape = 'u8[1024]{0}', space=vmem, size = 0x400, scoped, tag = 'output window, operand 1, single buffered']
    #allocation10 [shape = 's32[1]{0}', space=sflag, size = 0x4, scoped, tag = 'scoped memory for tpu_custom_call.1']
    %11 = vsyncpa [#allocation3], 0
    %12 = vsyncpa [#allocation6], 0
    %13 = vsyncpa [#allocation4], 0
    %14 = vsyncpa [#allocation10], 0
    // Predicated region
    $region2: #{tpu_custom_call.1} parent=1 // pred_check
      _
    $region3: #{tpu_custom_call.1} parent=1 // pred_check_branch
      %16 = sbr.rel (0) target = $region5
    $region4: #{tpu_custom_call.1} parent=1 // pred_region
      %s18 = ssub.s32 32, 32
      %19 = vsyncadd [#allocation3], %s18
      %s21 = sshll.u32 [#allocation2], 4
      %s22 = int_to_ptr.vmem [resolvable:$true] %s21
      %24 = dma.hbm_to_vmem [thread:$0]  %s0, 32, %s22, [#allocation3]
    $region5: #{tpu_custom_call.1} parent=1 // pred_fallthru
      _
    // Predicated region
    $region6: #{tpu_custom_call.1} parent=1 // pred_check
      _
    $region7: #{tpu_custom_call.1} parent=1 // pred_check_branch
      %26 = sbr.rel (0) target = $region9
    $region8: #{tpu_custom_call.1} parent=1 // pred_region
      %s28 = ssub.s32 256, 256
      %29 = vsyncadd [#allocation6], %s28
      %s30 = sshll.u32 [#allocation5], 4
      %s31 = int_to_ptr.vmem [resolvable:$true] %s30
      %36 = dma.hbm_to_vmem [thread:$0]  %s1, 256, %s31, [#allocation6], 128, 128, 8
    $region9: #{tpu_custom_call.1} parent=1 // pred_fallthru
      _
    // Predicated region
    $region10: #{tpu_custom_call.1} parent=1 // pred_check
      _
    $region11: #{tpu_custom_call.1} parent=1 // pred_check_branch
      %38 = sbr.rel (0) target = $region13
    $region12: #{tpu_custom_call.1} parent=1 // pred_region
      %s40 = ssub.s32 512, 512
      %41 = vsyncadd [#allocation6], %s40
      %s42 = sshll.u32 [#allocation7], 4
      %s43 = int_to_ptr.vmem [resolvable:$true] %s42
      %48 = dma.hbm_to_vmem [thread:$0]  %s2, 512, %s43, [#allocation6], 128, 128, 8
    $region13: #{tpu_custom_call.1} parent=1 // pred_fallthru
      _
    // Predicated region
    $region14: #{tpu_custom_call.1} parent=1 // pred_check
      _
    $region15: #{tpu_custom_call.1} parent=1 // pred_check_branch
      %50 = sbr.rel (0) target = $region17
    $region16: #{tpu_custom_call.1} parent=1 // pred_region
      _
    $region17: #{tpu_custom_call.1} parent=1 // pred_fallthru
      _
    // Predicated region
    $region18: #{tpu_custom_call.1} parent=1 // pred_check
      _
    $region19: #{tpu_custom_call.1} parent=1 // pred_check_branch
      %52 = sbr.rel (0) target = $region21
    $region20: #{tpu_custom_call.1} parent=1 // pred_region
      %53 = dma.done [#allocation3], 32
    $region21: #{tpu_custom_call.1} parent=1 // pred_fallthru
      _
    // Predicated region
    $region22: #{tpu_custom_call.1} parent=1 // pred_check
      _
    $region23: #{tpu_custom_call.1} parent=1 // pred_check_branch
      %55 = sbr.rel (0) target = $region25
    $region24: #{tpu_custom_call.1} parent=1 // pred_region
      %56 = dma.done [#allocation6], 256
    $region25: #{tpu_custom_call.1} parent=1 // pred_fallthru
      _
    // Predicated region
    $region26: #{tpu_custom_call.1} parent=1 // pred_check
      _
    $region27: #{tpu_custom_call.1} parent=1 // pred_check_branch
      %58 = sbr.rel (0) target = $region29
    $region28: #{tpu_custom_call.1} parent=1 // pred_region
      %59 = dma.done [#allocation6], 512
    $region29: #{tpu_custom_call.1} parent=1 // pred_fallthru
      _
    %v60 = vld [vmem:[#allocation5] sm:$0xff]
    %v61 = vld [vmem:[#allocation5 + $0x8] sm:$0xff]
    %v62 = vld [vmem:[#allocation7] sm:$0xff]
    %v63 = vld [vmem:[#allocation7 + $0x8] sm:$0xff]
    %v64 = vld [vmem:[#allocation7 + $0x10] sm:$0xff]
    %v65 = vld [vmem:[#allocation7 + $0x18] sm:$0xff]
    %vm66 = vcmask 261120
    %v68 = vsel %vm66, %v60, 0
    %v71 = vsel %vm66, %v61, 0
    %73 = vmatprep.subr.mxu0 0.0
    %74 = vmatpush1.msra.mxu0 %v62
    %75 = vmatprep.subr.mxu0 0.0
    %76 = vmatpush1.msra.mxu0 %v63
    %77 = vmatprep.subr.mxu0 0.0
    %78 = vmatpush1.msra.mxu0 %v64
    %79 = vmatprep.subr.mxu0 0.0
    %80 = vmatpush1.msra.mxu0 %v65
    %81 = vmatprep.subr.mxu0 0.0
    %82 = vmatpush1.msra.mxu0 0.0
    %83 = vmatprep.subr.mxu0 0.0
    %84 = vmatpush1.msra.mxu0 0.0
    %85 = vmatprep.subr.mxu0 0.0
    %86 = vmatpush1.msra.mxu0 0.0
    %87 = vmatprep.subr.mxu0 0.0
    %88 = vmatpush1.msra.mxu0 0.0
    %89 = vmatprep.subr.mxu0 0.0
    %90 = vmatpush1.msra.mxu0 0.0
    %91 = vmatprep.subr.mxu0 0.0
    %92 = vmatpush1.msra.mxu0 0.0
    %93 = vmatprep.subr.mxu0 0.0
    %94 = vmatpush1.msra.mxu0 0.0
    %95 = vmatprep.subr.mxu0 0.0
    %96 = vmatpush1.msra.mxu0 0.0
    %97 = vmatprep.subr.mxu0 0.0
    %98 = vmatpush1.msra.mxu0 0.0
    %99 = vmatprep.subr.mxu0 0.0
    %100 = vmatpush1.msra.mxu0 0.0
    %101 = vmatprep.subr.mxu0 0.0
    %102 = vmatpush1.msra.mxu0 0.0
    %103 = vmatprep.subr.mxu0 0.0
    %104 = vmatpush1.msra.mxu0 0.0
    %105 = vmatprep.subr.mxu0 0.0
    %106 = vmatpush1.msra.mxu0 0.0
    %107 = vmatprep.subr.mxu0 0.0
    %108 = vmatpush1.msra.mxu0 0.0
    %109 = vmatprep.subr.mxu0 0.0
    %110 = vmatpush1.msra.mxu0 0.0
    %111 = vmatprep.subr.mxu0 0.0
    %112 = vmatpush1.msra.mxu0 0.0
    %113 = vmatprep.subr.mxu0 0.0
    %114 = vmatpush1.msra.mxu0 0.0
    %115 = vmatprep.subr.mxu0 0.0
    %116 = vmatpush1.msra.mxu0 0.0
    %117 = vmatprep.subr.mxu0 0.0
    %118 = vmatpush1.msra.mxu0 0.0
    %119 = vmatprep.subr.mxu0 0.0
    %120 = vmatpush1.msra.mxu0 0.0
    %121 = vmatprep.subr.mxu0 0.0
    %122 = vmatpush1.msra.mxu0 0.0
    %123 = vmatprep.subr.mxu0 0.0
    %124 = vmatpush1.msra.mxu0 0.0
    %125 = vmatprep.subr.mxu0 0.0
    %126 = vmatpush1.msra.mxu0 0.0
    %127 = vmatprep.subr.mxu0 0.0
    %128 = vmatpush1.msra.mxu0 0.0
    %129 = vmatprep.subr.mxu0 0.0
    %130 = vmatpush1.msra.mxu0 0.0
    %131 = vmatprep.subr.mxu0 0.0
    %132 = vmatpush1.msra.mxu0 0.0
    %133 = vmatprep.subr.mxu0 0.0
    %134 = vmatpush1.msra.mxu0 0.0
    %135 = vmatprep.subr.mxu0 0.0
    %136 = vmatpush1.msra.mxu0 0.0
    %137 = vmatprep.mubr.f32.mxu0 0.0
    %138 = vmatmul.mubr.f32.gmra.mrb[0].mxu0 %v68
    %v139 = vpop.f32.mrb[0].mxu0
    %v140 = vadd.f32 0.0, %v139
    %v141 = vpop.f32.mrb[0].mxu0
    %142 = vmatprep.mubr.f32.mxu0 0.0
    %143 = vmatmul.mubr.f32.gmra.mrb[0].mxu0 %v71
    %v144 = vpop.f32.mrb[0].mxu0
    %v145 = vadd.f32 0.0, %v144
    %v146 = vpop.f32.mrb[0].mxu0
    %147 = vdwg.mxu0
    %v148 = vld [vmem:[#allocation2] sm:$0x3]
    %v151 = vunpack.c.l.s4 1966171168
    %v152 = vunpack.c.0.s8 %v151
    %v153 = vlaneseq
    %v154 = vshrl.u32 %v153, 7
    %v155 = vsub.s32 %v152, %v154
    %v156 = vrot.slane %v148, %v155
    %v157 = vcombine.high %v156, %v156
    %v159 = vunpack.c.l.s4 1966171168
    %v160 = vunpack.c.0.s8 %v159
    %v161 = vlaneseq
    %v162 = vshrl.u32 %v161, 7
    %v163 = vsub.s32 %v160, %v162
    %v164 = vrot.slane %v156, %v163
    %v166 = vunpack.c.l.s4 1966171168
    %v167 = vunpack.c.0.s8 %v166
    %v168 = vlaneseq
    %v169 = vshrl.u32 %v168, 7
    %v170 = vsub.s32 %v167, %v169
    %v171 = vrot.slane %v157, %v170
    %v172 = vlaneseq
    %v173 = vshrl.u32 %v172, 7
    %v174 = vsub.s32 0, %v173
    %v175 = vrot.slane %v164, %v174
    %v176 = vlaneseq
    %v177 = vshrl.u32 %v176, 7
    %v178 = vsub.s32 0, %v177
    %v179 = vrot.slane %v171, %v178
    %v182 = vadd.f32 %v175, %v140
    %v183 = vadd.f32 %v179, %v145
    %v184 = vtanh.pop %v182
    %v185 = vtanh.pop %v183
    %v186 = vld [vmem:[%s3] sm:$0x1]
    %v188 = vlaneseq
    %v189 = vshrl.u32 %v188, 7
    %v190 = vsub.s32 0, %v189
    %v191 = vrot.slane %v186, %v190
    %v193 = vmul.f32 %v184, %v191
    %v194 = vmul.f32 %v185, %v191
    %v195 = vsel %vm66, %v193, 0.0
    %196 = vadd.xlane.f32.xlu0 %v195
    %v197 = vpop.xlane.xlu0 %196
    %v198 = vsel %vm66, %v194, 0.0
    %199 = vadd.xlane.f32.xlu0 %v198
    %v200 = vpop.xlane.xlu0 %199
    %v203 = vlaneseq
    %v204 = vand.u32 %v203, 127
    %v205 = vlaneseq
    %v206 = vshrl.u32 %v205, 7
    %v207 = vsub.s32 %v204, %v206
    %v208 = vrot.slane %v197, %v207
    %v209 = vlaneseq
    %v210 = vshrl.u32 %v209, 7
    %v211 = vsub.s32 %v204, %v210
    %v212 = vrot.slane %v200, %v211
    %vm213 = vcmask 1041409
    %v214 = vsel %vm213, %v212, %v208
    %vm216 = vcmask 58368
    %v217 = vsel %vm216, %v214, -inf
    %218 = vmax.xlane.f32.xlu0 %v217
    %v219 = vpop.xlane.xlu0 %218
    %v221 = vlaneseq
    %v222 = vshrl.u32 %v221, 7
    %v223 = vsub.s32 0, %v222
    %v224 = vrot.slane %v219, %v223
    %v225 = vlaneseq
    %v226 = vshrl.u32 %v225, 7
    %v227 = vsub.s32 1, %v226
    %v228 = vrot.slane %v219, %v227
    %v231 = vsub.f32 %v197, %v224
    %v232 = vsub.f32 %v200, %v228
    %v233 = vmul.f32 %v231, 1.442695
    %v234 = vpow.pop %v233
    %v235 = vmul.f32 %v232, 1.442695
    %v236 = vpow.pop %v235
    %239 = vset.pattern.permute.xlu0 0
    %240 = vperm.xlu0 %239, %v234
    %v241 = vpop.permute.xlu0 %240
    %242 = vset.pattern.permute.xlu0 0
    %243 = vperm.xlu0 %242, %v236
    %v244 = vpop.permute.xlu0 %243
    %v245 = vlaneseq
    %v246 = vshrl.u32 %v245, 7
    %v247 = vsub.s32 %v204, %v246
    %v248 = vrot.slane %v241, %v247
    %v249 = vlaneseq
    %v250 = vshrl.u32 %v249, 7
    %v251 = vsub.s32 %v204, %v250
    %v252 = vrot.slane %v244, %v251
    %v253 = vsel %vm213, %v252, %v248
    %v255 = vsel %vm216, %v253, 0.0
    %256 = vadd.xlane.f32.xlu0 %v255
    %v257 = vpop.xlane.xlu0 %256
    %v258 = vrcp.pop %v257
    %v259 = vmul.f32 %v257, %v258
    %v260 = vsub.f32 2.0, %v259
    %v261 = vmul.f32 %v258, %v260
    %v264 = vmul.f32 %v241, %v60
    %v265 = vmul.f32 %v244, %v61
    %v266 = vsel %vm66, %v264, 0.0
    %v267 = vrot.slane %v266, 4
    %v268 = vadd.f32 %v266, %v267
    %v269 = vrot.slane %v268, 2
    %v270 = vadd.f32 %v268, %v269
    %v271 = vrot.slane %v270, 1
    %v272 = vadd.f32 %v270, %v271
    %v273 = vsel %vm66, %v265, 0.0
    %v274 = vrot.slane %v273, 4
    %v275 = vadd.f32 %v273, %v274
    %v276 = vrot.slane %v275, 2
    %v277 = vadd.f32 %v275, %v276
    %v278 = vrot.slane %v277, 1
    %v279 = vadd.f32 %v277, %v278
    %v281 = vrot.slane %v261, 1
    %v284 = vmul.f32 %v272, %v261
    %v285 = vmul.f32 %v279, %v281
    %v288 = vrot.slane %v285, 7
    %v289 = vsel %vm213, %v288, %v284
    %vm291 = vcmask 254976
    %292 = vst.msk [vmem:[#allocation8] sm:$0x3] %vm291, %v289
    %v293 = vlaneseq
    %v294 = vshrl.u32 %v293, 7
    %v295 = vsub.s32 0, %v294
    %v296 = vrot.slane %v261, %v295
    %v297 = vlaneseq
    %v298 = vshrl.u32 %v297, 7
    %v299 = vsub.s32 1, %v298
    %v300 = vrot.slane %v261, %v299
    %v303 = vmul.f32 %v234, %v296
    %v304 = vmul.f32 %v236, %v300
    %307 = vset.pattern.permute.xlu0 0
    %308 = vperm.xlu0 %307, %v303
    %v309 = vpop.permute.xlu0 %308
    %310 = vset.pattern.permute.xlu0 0
    %311 = vperm.xlu0 %310, %v304
    %v312 = vpop.permute.xlu0 %311
    %v313 = vlaneseq
    %v314 = vshrl.u32 %v313, 7
    %v315 = vsub.s32 %v204, %v314
    %v316 = vrot.slane %v309, %v315
    %v317 = vlaneseq
    %v318 = vshrl.u32 %v317, 7
    %v319 = vsub.s32 %v204, %v318
    %v320 = vrot.slane %v312, %v319
    %v321 = vsel %vm213, %v320, %v316
    %323 = vst.msk [vmem:[#allocation9] sm:$0x3] %vm216, %v321
    // Predicated region
    $region30: #{tpu_custom_call.1} parent=1 // pred_check
      _
    $region31: #{tpu_custom_call.1} parent=1 // pred_check_branch
      %325 = sbr.rel (0) target = $region33
    $region32: #{tpu_custom_call.1} parent=1 // pred_region
      %s327 = ssub.s32 32, 32
      %328 = vsyncadd [#allocation4], %s327
      %s330 = sshll.u32 [#allocation8], 4
      %s331 = int_to_ptr.vmem [resolvable:$true] %s330
      %333 = dma.vmem_to_hbm [thread:$0]  %s331, 32, %s4, [#allocation4]
    $region33: #{tpu_custom_call.1} parent=1 // pred_fallthru
      _
    // Predicated region
    $region34: #{tpu_custom_call.1} parent=1 // pred_check
      _
    $region35: #{tpu_custom_call.1} parent=1 // pred_check_branch
      %335 = sbr.rel (0) target = $region37
    $region36: #{tpu_custom_call.1} parent=1 // pred_region
      %s337 = ssub.s32 32, 32
      %338 = vsyncadd [#allocation10], %s337
      %s340 = sshll.u32 [#allocation9], 4
      %s341 = int_to_ptr.vmem [resolvable:$true] %s340
      %343 = dma.vmem_to_hbm [thread:$0]  %s341, 32, %s5, [#allocation10]
    $region37: #{tpu_custom_call.1} parent=1 // pred_fallthru
      _
    // Predicated region
    $region38: #{tpu_custom_call.1} parent=1 // pred_check
      _
    $region39: #{tpu_custom_call.1} parent=1 // pred_check_branch
      %345 = sbr.rel (0) target = $region41
    $region40: #{tpu_custom_call.1} parent=1 // pred_region
      %346 = dma.done [#allocation4], 32
    $region41: #{tpu_custom_call.1} parent=1 // pred_fallthru
      _
    // Predicated region
    $region42: #{tpu_custom_call.1} parent=1 // pred_check
      _
    $region43: #{tpu_custom_call.1} parent=1 // pred_check_branch
      %348 = sbr.rel (0) target = $region45
    $region44: #{tpu_custom_call.1} parent=1 // pred_region
      %349 = dma.done [#allocation10], 32
    $region45: #{tpu_custom_call.1} parent=1 // pred_fallthru
      _
    %350 = vsyncpa [#allocation3], 1
    %351 = vsyncpa [#allocation6], 1
    %352 = vsyncpa [#allocation4], 1
    %353 = vsyncpa [#allocation10], 1

</llo_original>
